<compile_context>
chip_gen: v6e
topology: v6e:2x2x1
jax: 0.10.0
libtpu: 0.0.40
codegen_flags: <defaults>
</compile_context>

<pallas_src>
import functools

import jax
import jax.numpy as jnp
from jax import lax
from jax.experimental import pallas as pl
from jax.experimental.pallas import tpu as pltpu


def _round_up(x, m):
    return ((x + m - 1) // m) * m


def pack_ensemble_params(w1, b1, w2, b2):
    """One-time (parameter-load-time) re-layout of the ensemble weights.

    Returns a single contiguous f32 slab `params` of shape [rows, mh_pad] and a
    dict of static row offsets.  Layout (all sections sublane-aligned):
      rows [r_w1 : r_w1+d_in]  : W1 concatenated along hidden axis, [d_in, M*H] (lane-padded)
      row   r_b1               : b1 concatenated, [M*H] (lane-padded)
      rows [r_w2 : r_w2+d_out] : W2^T pre-scaled by 1/M, [d_out, M*H] (lane-padded)
      row   r_b2               : mean_m(b2), first d_out lanes
    """
    num_models, d_in, hidden = w1.shape
    _, _, d_out = w2.shape
    mh = num_models * hidden
    mh_pad = _round_up(mh, 128)          # 320 -> 384: clean vreg / MXU layout

    # W1: [M, d_in, H] -> [d_in, M*H], zero-padded lanes.
    w1_all = jnp.transpose(w1, (1, 0, 2)).reshape(d_in, mh)
    w1_all = jnp.pad(w1_all, ((0, 0), (0, mh_pad - mh)))
    b1_all = jnp.pad(b1.reshape(1, mh), ((0, 0), (0, mh_pad - mh)))

    # W2 stored transposed [d_out, M*H], pre-scaled by 1/M so the second
    # contraction performs the ensemble mean.  Padded hidden columns are zero
    # in both W1 and W2 (and ReLU(0)=0), so the padding is exact.
    w2t = jnp.transpose(w2 * (1.0 / num_models), (2, 0, 1)).reshape(d_out, mh)
    w2t = jnp.pad(w2t, ((0, 0), (0, mh_pad - mh)))

    b2_mean = jnp.mean(b2, axis=0).reshape(1, d_out)
    b2_mean = jnp.pad(b2_mean, ((0, 0), (0, mh_pad - d_out)))

    # Sublane-aligned row offsets inside the packed slab.
    r_w1 = 0
    r_b1 = _round_up(d_in, 8)
    r_w2 = r_b1 + 8
    r_b2 = r_w2 + _round_up(d_out, 8)
    rows = r_b2 + 8

    params = jnp.zeros((rows, mh_pad), jnp.float32)
    params = params.at[r_w1:r_w1 + d_in, :].set(w1_all)
    params = params.at[r_b1, :].set(b1_all[0])
    params = params.at[r_w2:r_w2 + d_out, :].set(w2t)
    params = params.at[r_b2, :].set(b2_mean[0])

    meta = dict(d_in=d_in, d_out=d_out, mh_pad=mh_pad,
                r_w1=r_w1, r_b1=r_b1, r_w2=r_w2, r_b2=r_b2)
    return params, meta


def _ensemble_kernel(obs_ref, params_ref, out_ref, *, d_in, d_out,
                     r_w1, r_b1, r_w2, r_b2):
    # Recover the four operands from the single packed slab with static slices.
    w1 = params_ref[r_w1:r_w1 + d_in, :]            # [d_in, mh_pad]
    b1 = params_ref[r_b1:r_b1 + 1, :]               # [1, mh_pad]
    w2t = params_ref[r_w2:r_w2 + d_out, :]          # [d_out, mh_pad]
    b2 = params_ref[r_b2:r_b2 + 1, :][:, 0:d_out]   # [1, d_out]

    # Fused forward pass for ALL ensemble members in two MXU matmuls:
    #   H   = relu(obs @ [W1_0 | ... | W1_{M-1}] + [b1_0 | ... | b1_{M-1}])
    #   out = H  (.)  [W2_0/M ; ... ; W2_{M-1}/M]^T  +  mean_m(b2_m)
    h = jnp.dot(obs_ref[...], w1, preferred_element_type=jnp.float32)
    h = jnp.maximum(h + b1, 0.0)
    out = lax.dot_general(h, w2t, (((1,), (1,)), ((), ())),
                          preferred_element_type=jnp.float32)
    out_ref[...] = (out + b2).astype(out_ref.dtype)


def ensemble_forward(obs, params, meta):
    """Mean over ensemble members of MLP(obs) — equivalent of Ensemble.forward.

    `params`/`meta` come from `pack_ensemble_params` (computed once at weight
    load time, NOT per call).
    """
    batch, d_in = obs.shape
    d_out = meta["d_out"]
    mh_pad = meta["mh_pad"]

    kernel = functools.partial(
        _ensemble_kernel, d_in=d_in, d_out=d_out,
        r_w1=meta["r_w1"], r_b1=meta["r_b1"],
        r_w2=meta["r_w2"], r_b2=meta["r_b2"])

    flops = 2 * batch * d_in * mh_pad + 2 * batch * mh_pad * d_out
    bytes_accessed = 4 * (obs.size + params.size + batch * d_out)

    vmem = pl.BlockSpec(memory_space=pltpu.MemorySpace.VMEM)
    return pl.pallas_call(
        kernel,
        out_shape=jax.ShapeDtypeStruct((batch, d_out), obs.dtype),
        in_specs=[vmem, vmem],
        out_specs=vmem,
        cost_estimate=pl.CostEstimate(
            flops=flops, transcendentals=0, bytes_accessed=bytes_accessed),
    )(obs, params)


def ensemble_reference(obs, w1, b1, w2, b2):
    """Pure-JAX reference: mean over stacked per-member outputs (PyTorch semantics)."""
    def one(wa, ba, wb, bb):
        h = jnp.maximum(obs @ wa + ba, 0.0)
        return h @ wb + bb
    acts = jax.vmap(one)(w1, b1, w2, b2)            # [M, B, D_out]
    return jnp.mean(acts, axis=0)


if __name__ == "__main__":
    num_models = 5
    batch, d_in, hidden, d_out = 8, 32, 64, 8

    key = jax.random.PRNGKey(0)
    k_obs, k_w1, k_b1, k_w2, k_b2 = jax.random.split(key, 5)

    obs = jax.random.normal(k_obs, (batch, d_in), dtype=jnp.float32)
    w1 = jax.random.normal(k_w1, (num_models, d_in, hidden), dtype=jnp.float32) * 0.1
    b1 = jax.random.normal(k_b1, (num_models, hidden), dtype=jnp.float32) * 0.01
    w2 = jax.random.normal(k_w2, (num_models, hidden, d_out), dtype=jnp.float32) * 0.1
    b2 = jax.random.normal(k_b2, (num_models, d_out), dtype=jnp.float32) * 0.01

    # One-time weight packing (parameter-load time, outside the per-call path).
    params, meta = pack_ensemble_params(w1, b1, w2, b2)
    params = jax.block_until_ready(params)

    out = ensemble_forward(obs, params, meta)
    out = jax.block_until_ready(out)

    ref = ensemble_reference(obs, w1, b1, w2, b2)
    assert out.shape == (batch, d_out)
    assert jnp.allclose(out, ref, atol=1e-5, rtol=1e-5)

    print("KERNEL_OK")
</pallas_src>

<mosaic_0001>
module attributes {stable_mosaic.version = 11 : i64} {
  func.func @_ensemble_kernel(%arg0: memref<8x32xf32, #tpu.memory_space<vmem>>, %arg1: memref<56x384xf32, #tpu.memory_space<vmem>>, %arg2: memref<8x8xf32, #tpu.memory_space<vmem>>) attributes {dimension_semantics = [], scalar_prefetch = 0 : i64, scratch_operands = 0 : i64, tpu.core_type = #tpu.core_type<tc>} {
    %c0 = arith.constant 0 : index
    %c0_0 = arith.constant 0 : index
    %0 = vector.load %arg1[%c0, %c0_0] : memref<56x384xf32, #tpu.memory_space<vmem>>, vector<32x384xf32>
    %c32 = arith.constant 32 : index
    %c0_1 = arith.constant 0 : index
    %1 = vector.load %arg1[%c32, %c0_1] : memref<56x384xf32, #tpu.memory_space<vmem>>, vector<1x384xf32>
    %c40 = arith.constant 40 : index
    %c0_2 = arith.constant 0 : index
    %2 = vector.load %arg1[%c40, %c0_2] : memref<56x384xf32, #tpu.memory_space<vmem>>, vector<8x384xf32>
    %c48 = arith.constant 48 : index
    %c0_3 = arith.constant 0 : index
    %3 = vector.load %arg1[%c48, %c0_3] : memref<56x384xf32, #tpu.memory_space<vmem>>, vector<1x384xf32>
    %4 = vector.extract_strided_slice %3 {offsets = [0, 0], sizes = [1, 8], strides = [1, 1]} : vector<1x384xf32> to vector<1x8xf32>
    %c0_4 = arith.constant 0 : index
    %c0_5 = arith.constant 0 : index
    %5 = vector.load %arg0[%c0_4, %c0_5] : memref<8x32xf32, #tpu.memory_space<vmem>>, vector<8x32xf32>
    %cst = arith.constant dense<0.000000e+00> : vector<8x384xf32>
    %6 = tpu.matmul %5, %0, %cst {dimension_numbers = #tpu.dot_dimension_numbers<[1], [0], [0], [1], [0, 0, 1, 1], [], []>} : vector<8x32xf32>, vector<32x384xf32>, vector<8x384xf32> -> vector<8x384xf32>
    %7 = vector.broadcast %1 : vector<1x384xf32> to vector<8x384xf32>
    %8 = arith.addf %6, %7 : vector<8x384xf32>
    %cst_6 = arith.constant 0.000000e+00 : f32
    %9 = vector.broadcast %cst_6 : f32 to vector<8x384xf32>
    %10 = arith.maximumf %8, %9 : vector<8x384xf32>
    %cst_7 = arith.constant dense<0.000000e+00> : vector<8x8xf32>
    %11 = tpu.matmul %10, %2, %cst_7 {dimension_numbers = #tpu.dot_dimension_numbers<[1], [1], [0], [0], [0, 0, 1, 0], [], []>} : vector<8x384xf32>, vector<8x384xf32>, vector<8x8xf32> -> vector<8x8xf32>
    %12 = vector.broadcast %4 : vector<1x8xf32> to vector<8x8xf32>
    %13 = arith.addf %11, %12 : vector<8x8xf32>
    %c0_8 = arith.constant 0 : index
    %c0_9 = arith.constant 0 : index
    %14 = vector.load %arg2[%c0_8, %c0_9] : memref<8x8xf32, #tpu.memory_space<vmem>>, vector<8x8xf32>
    tpu.vector_store %arg2[%c0_8, %c0_9], %13 {strides = array<i32>} : memref<8x8xf32, #tpu.memory_space<vmem>>, vector<8x8xf32>,
    return
  }
}

</mosaic_0001>

<llo_original>
// kernel: tpu_custom_call.1
$region0: #{tpu_custom_call.1}
  #allocation0 [shape = 'u32[]', space=smem, size = 0x4, offset = 0x4, fixed_abs, tag = 'smem constant byte address 0x4 - core index']
  #allocation1 [shape = 'u32[144,128]{1,0:T(1,128)}', space=vmem, size = 0x12000, scoped, tag = 'internal scratch']
  %s0 = inlined_call_operand.hbm [shape: f32[8,32], index: 0, kind: input, shape index: {}]
  %s1 = inlined_call_operand.hbm [shape: f32[56,384], index: 1, kind: input, shape index: {}]
  %s2 = inlined_call_operand.hbm [shape: f32[8,8], index: 2, kind: output, shape index: {}]
  %s3 = sld [smem:[#allocation0]]
  $region26: #{tpu_custom_call.1} parent=0
    _
  %s5 = ssub.s32 1, %s3
  %s6 = scalar_select 0, %s5, %s3
  $region1: #{tpu_custom_call.1} parent=0
    #allocation2 [shape = 'u8[4096]{0}', space=vmem, size = 0x1000, scoped, tag = 'input window, operand 0, single buffered']
    #allocation3 [shape = 's32[1]{0}', space=sflag, size = 0x4, scoped, tag = 'scoped memory for tpu_custom_call.1']
    #allocation4 [shape = 's32[1]{0}', space=sflag, size = 0x4, scoped, tag = 'scoped memory for tpu_custom_call.1']
    #allocation5 [shape = 'u8[86016]{0}', space=vmem, size = 0x15000, scoped, tag = 'input window, operand 1, single buffered']
    #allocation6 [shape = 's32[1]{0}', space=sflag, size = 0x4, scoped, tag = 'scoped memory for tpu_custom_call.1']
    #allocation7 [shape = 'u8[4096]{0}', space=vmem, size = 0x1000, scoped, tag = 'output window, operand 0, single buffered']
    %7 = vsyncpa [#allocation3], 0
    %8 = vsyncpa [#allocation6], 0
    %9 = vsyncpa [#allocation4], 0
    // Predicated region
    $region2: #{tpu_custom_call.1} parent=1 // pred_check
      _
    $region3: #{tpu_custom_call.1} parent=1 // pred_check_branch
      %11 = sbr.rel (0) target = $region5
    $region4: #{tpu_custom_call.1} parent=1 // pred_region
      %s13 = ssub.s32 128, 128
      %14 = vsyncadd [#allocation3], %s13
      %s16 = sshll.u32 [#allocation2], 4
      %s17 = int_to_ptr.vmem [resolvable:$true] %s16
      %19 = dma.hbm_to_vmem [thread:$0]  %s0, 128, %s17, [#allocation3]
    $region5: #{tpu_custom_call.1} parent=1 // pred_fallthru
      _
    // Predicated region
    $region6: #{tpu_custom_call.1} parent=1 // pred_check
      _
    $region7: #{tpu_custom_call.1} parent=1 // pred_check_branch
      %21 = sbr.rel (0) target = $region9
    $region8: #{tpu_custom_call.1} parent=1 // pred_region
      %s23 = ssub.s32 2688, 2688
      %24 = vsyncadd [#allocation6], %s23
      %s25 = sshll.u32 [#allocation5], 4
      %s26 = int_to_ptr.vmem [resolvable:$true] %s25
      %31 = dma.hbm_to_vmem [thread:$0]  %s1, 2688, %s26, [#allocation6], 384, 384, 24
    $region9: #{tpu_custom_call.1} parent=1 // pred_fallthru
      _
    // Predicated region
    $region10: #{tpu_custom_call.1} parent=1 // pred_check
      _
    $region11: #{tpu_custom_call.1} parent=1 // pred_check_branch
      %33 = sbr.rel (0) target = $region13
    $region12: #{tpu_custom_call.1} parent=1 // pred_region
      %34 = dma.done [#allocation3], 128
    $region13: #{tpu_custom_call.1} parent=1 // pred_fallthru
      _
    // Predicated region
    $region14: #{tpu_custom_call.1} parent=1 // pred_check
      _
    $region15: #{tpu_custom_call.1} parent=1 // pred_check_branch
      %36 = sbr.rel (0) target = $region17
    $region16: #{tpu_custom_call.1} parent=1 // pred_region
      %37 = dma.done [#allocation6], 2688
    $region17: #{tpu_custom_call.1} parent=1 // pred_fallthru
      _
    %v38 = vld [vmem:[#allocation5] sm:$0xff]
    %v39 = vld [vmem:[#allocation5 + $0x8] sm:$0xff]
    %v40 = vld [vmem:[#allocation5 + $0x10] sm:$0xff]
    %v41 = vld [vmem:[#allocation5 + $0x18] sm:$0xff]
    %v42 = vld [vmem:[#allocation5 + $0x20] sm:$0xff]
    %v43 = vld [vmem:[#allocation5 + $0x28] sm:$0xff]
    %v44 = vld [vmem:[#allocation5 + $0x30] sm:$0xff]
    %v45 = vld [vmem:[#allocation5 + $0x38] sm:$0xff]
    %v46 = vld [vmem:[#allocation5 + $0x40] sm:$0xff]
    %v47 = vld [vmem:[#allocation5 + $0x48] sm:$0xff]
    %v48 = vld [vmem:[#allocation5 + $0x50] sm:$0xff]
    %v49 = vld [vmem:[#allocation5 + $0x58] sm:$0xff]
    %s50 = scalar_lea.vmem [#allocation5], 96
    %v51 = vld [vmem:[%s50] ss:$8 sm:$0x7]
    %v52 = vld [vmem:[#allocation5 + $0x78] sm:$0xff]
    %v53 = vld [vmem:[#allocation5 + $0x80] sm:$0xff]
    %v54 = vld [vmem:[#allocation5 + $0x88] sm:$0xff]
    %s55 = scalar_lea.vmem [#allocation5], 144
    %v56 = vld [vmem:[%s55] ss:$8 sm:$0x7]
    %v57 = vld [vmem:[#allocation2] sm:$0xff]
    %v59 = vlaneseq
    %v60 = vshrl.u32 %v59, 7
    %v61 = vsub.s32 0, %v60
    %v62 = vrot.slane %v51, %v61
    %v63 = vlaneseq
    %v64 = vshrl.u32 %v63, 7
    %v65 = vsub.s32 1, %v64
    %v66 = vrot.slane %v51, %v65
    %v67 = vlaneseq
    %v68 = vshrl.u32 %v67, 7
    %v69 = vsub.s32 2, %v68
    %v70 = vrot.slane %v51, %v69
    %vm74 = vcmask 261120
    %v76 = vsel %vm74, %v57, 0
    %78 = vmatprep.subr.mxu0 0.0
    %79 = vmatpush1.msra.mxu0 0.0
    %80 = vmatprep.subr.mxu0 0.0
    %81 = vmatpush1.msra.mxu0 0.0
    %82 = vmatprep.subr.mxu0 0.0
    %83 = vmatpush1.msra.mxu0 0.0
    %84 = vmatprep.subr.mxu0 0.0
    %85 = vmatpush1.msra.mxu0 0.0
    %86 = vmatprep.subr.mxu0 0.0
    %87 = vmatpush1.msra.mxu0 0.0
    %88 = vmatprep.subr.mxu0 0.0
    %89 = vmatpush1.msra.mxu0 0.0
    %90 = vmatprep.subr.mxu0 0.0
    %91 = vmatpush1.msra.mxu0 0.0
    %92 = vmatprep.subr.mxu0 0.0
    %93 = vmatpush1.msra.mxu0 0.0
    %94 = vmatprep.subr.mxu0 0.0
    %95 = vmatpush1.msra.mxu0 0.0
    %96 = vmatprep.subr.mxu0 0.0
    %97 = vmatpush1.msra.mxu0 0.0
    %98 = vmatprep.subr.mxu0 0.0
    %99 = vmatpush1.msra.mxu0 0.0
    %100 = vmatprep.subr.mxu0 0.0
    %101 = vmatpush1.msra.mxu0 0.0
    %102 = vmatprep.subr.mxu0 %v48
    %103 = vmatpush1.msra.mxu0 %v47
    %104 = vmatprep.subr.mxu0 %v45
    %105 = vmatpush1.msra.mxu0 %v44
    %106 = vmatprep.subr.mxu0 %v42
    %107 = vmatpush1.msra.mxu0 %v41
    %108 = vmatprep.subr.mxu0 %v39
    %109 = vmatpush1.msra.mxu0 %v38
    %110 = vmatprep.subr.mxu0 0.0
    %111 = vmatpush2.msra.mxu0 0.0
    %112 = vmatprep.subr.mxu0 0.0
    %113 = vmatpush2.msra.mxu0 0.0
    %114 = vmatprep.subr.mxu0 0.0
    %115 = vmatpush2.msra.mxu0 0.0
    %116 = vmatprep.subr.mxu0 0.0
    %117 = vmatpush2.msra.mxu0 0.0
    %118 = vmatprep.subr.mxu0 0.0
    %119 = vmatpush2.msra.mxu0 0.0
    %120 = vmatprep.subr.mxu0 0.0
    %121 = vmatpush2.msra.mxu0 0.0
    %122 = vmatprep.subr.mxu0 0.0
    %123 = vmatpush2.msra.mxu0 0.0
    %124 = vmatprep.subr.mxu0 0.0
    %125 = vmatpush2.msra.mxu0 0.0
    %126 = vmatprep.subr.mxu0 0.0
    %127 = vmatpush2.msra.mxu0 0.0
    %128 = vmatprep.subr.mxu0 0.0
    %129 = vmatpush2.msra.mxu0 0.0
    %130 = vmatprep.subr.mxu0 0.0
    %131 = vmatpush2.msra.mxu0 0.0
    %132 = vmatprep.subr.mxu0 0.0
    %133 = vmatpush2.msra.mxu0 0.0
    %134 = vmatprep.subr.mxu0 0.0
    %135 = vmatpush2.msra.mxu0 0.0
    %136 = vmatprep.subr.mxu0 0.0
    %137 = vmatpush2.msra.mxu0 0.0
    %138 = vmatprep.subr.mxu0 0.0
    %139 = vmatpush2.msra.mxu0 0.0
    %140 = vmatprep.subr.mxu0 0.0
    %141 = vmatpush2.msra.mxu0 0.0
    %142 = vmatprep.mubr.f32.mxu0 0.0
    %143 = vmatmul.mubr.f32.gmra.mxu0 %v76
    %v144 = vpop.f32.mrf.mxu0
    %v145 = vadd.f32 %v62, %v144
    %v146 = vpop.f32.mrf.mxu0
    %v147 = vadd.f32 %v66, %v146
    %148 = vdwg.mxu0
    %149 = vmatprep.subr.mxu0 0.0
    %150 = vmatpush1.msra.mxu0 0.0
    %151 = vmatprep.subr.mxu0 0.0
    %152 = vmatpush1.msra.mxu0 0.0
    %153 = vmatprep.subr.mxu0 0.0
    %154 = vmatpush1.msra.mxu0 0.0
    %155 = vmatprep.subr.mxu0 0.0
    %156 = vmatpush1.msra.mxu0 0.0
    %157 = vmatprep.subr.mxu0 0.0
    %158 = vmatpush1.msra.mxu0 0.0
    %159 = vmatprep.subr.mxu0 0.0
    %160 = vmatpush1.msra.mxu0 0.0
    %161 = vmatprep.subr.mxu0 0.0
    %162 = vmatpush1.msra.mxu0 0.0
    %163 = vmatprep.subr.mxu0 0.0
    %164 = vmatpush1.msra.mxu0 0.0
    %165 = vmatprep.subr.mxu0 0.0
    %166 = vmatpush1.msra.mxu0 0.0
    %167 = vmatprep.subr.mxu0 0.0
    %168 = vmatpush1.msra.mxu0 0.0
    %169 = vmatprep.subr.mxu0 0.0
    %170 = vmatpush1.msra.mxu0 0.0
    %171 = vmatprep.subr.mxu0 0.0
    %172 = vmatpush1.msra.mxu0 0.0
    %173 = vmatprep.subr.mxu0 0.0
    %174 = vmatpush1.msra.mxu0 %v49
    %175 = vmatprep.subr.mxu0 0.0
    %176 = vmatpush1.msra.mxu0 %v46
    %177 = vmatprep.subr.mxu0 0.0
    %178 = vmatpush1.msra.mxu0 %v43
    %179 = vmatprep.subr.mxu0 0.0
    %180 = vmatpush1.msra.mxu0 %v40
    %181 = vmatprep.subr.mxu0 0.0
    %182 = vmatpush2.msra.mxu0 0.0
    %183 = vmatprep.subr.mxu0 0.0
    %184 = vmatpush2.msra.mxu0 0.0
    %185 = vmatprep.subr.mxu0 0.0
    %186 = vmatpush2.msra.mxu0 0.0
    %187 = vmatprep.subr.mxu0 0.0
    %188 = vmatpush2.msra.mxu0 0.0
    %189 = vmatprep.subr.mxu0 0.0
    %190 = vmatpush2.msra.mxu0 0.0
    %191 = vmatprep.subr.mxu0 0.0
    %192 = vmatpush2.msra.mxu0 0.0
    %193 = vmatprep.subr.mxu0 0.0
    %194 = vmatpush2.msra.mxu0 0.0
    %195 = vmatprep.subr.mxu0 0.0
    %196 = vmatpush2.msra.mxu0 0.0
    %197 = vmatprep.subr.mxu0 0.0
    %198 = vmatpush2.msra.mxu0 0.0
    %199 = vmatprep.subr.mxu0 0.0
    %200 = vmatpush2.msra.mxu0 0.0
    %201 = vmatprep.subr.mxu0 0.0
    %202 = vmatpush2.msra.mxu0 0.0
    %203 = vmatprep.subr.mxu0 0.0
    %204 = vmatpush2.msra.mxu0 0.0
    %205 = vmatprep.subr.mxu0 0.0
    %206 = vmatpush2.msra.mxu0 0.0
    %207 = vmatprep.subr.mxu0 0.0
    %208 = vmatpush2.msra.mxu0 0.0
    %209 = vmatprep.subr.mxu0 0.0
    %210 = vmatpush2.msra.mxu0 0.0
    %211 = vmatprep.subr.mxu0 0.0
    %212 = vmatpush2.msra.mxu0 0.0
    %213 = vmatprep.mubr.f32.mxu0 0.0
    %214 = vmatmul.mubr.f32.gmra.mxu0 %v76
    %v215 = vpop.f32.mrf.mxu0
    %v216 = vadd.f32 %v70, %v215
    %v217 = vpop.f32.mrf.mxu0
    %218 = vdwg.mxu0
    %v219 = vmax.f32 %v145, 0.0
    %v220 = vmax.f32 %v147, 0.0
    %v221 = vmax.f32 %v216, 0.0
    %v223 = vlaneseq
    %v224 = vshrl.u32 %v223, 7
    %v225 = vsub.s32 0, %v224
    %v226 = vrot.slane %v56, %v225
    %228 = vmatprep.subr.mxu0 0.0
    %229 = vmatpush1.xpose.msra.mxu0 0.0
    %230 = vmatprep.subr.mxu0 0.0
    %231 = vmatpush1.xpose.msra.mxu0 0.0
    %232 = vmatprep.subr.mxu0 0.0
    %233 = vmatpush1.xpose.msra.mxu0 0.0
    %234 = vmatprep.subr.mxu0 0.0
    %235 = vmatpush1.xpose.msra.mxu0 0.0
    %236 = vmatprep.subr.mxu0 0.0
    %237 = vmatpush1.xpose.msra.mxu0 0.0
    %238 = vmatprep.subr.mxu0 0.0
    %239 = vmatpush1.xpose.msra.mxu0 0.0
    %240 = vmatprep.subr.mxu0 0.0
    %241 = vmatpush1.xpose.msra.mxu0 0.0
    %242 = vmatprep.subr.mxu0 0.0
    %243 = vmatpush1.xpose.msra.mxu0 0.0
    %244 = vmatprep.subr.mxu0 0.0
    %245 = vmatpush1.xpose.msra.mxu0 0.0
    %246 = vmatprep.subr.mxu0 0.0
    %247 = vmatpush1.xpose.msra.mxu0 0.0
    %248 = vmatprep.subr.mxu0 0.0
    %249 = vmatpush1.xpose.msra.mxu0 0.0
    %250 = vmatprep.subr.mxu0 0.0
    %251 = vmatpush1.xpose.msra.mxu0 0.0
    %252 = vmatprep.subr.mxu0 0.0
    %253 = vmatpush1.xpose.msra.mxu0 0.0
    %254 = vmatprep.subr.mxu0 0.0
    %255 = vmatpush1.xpose.msra.mxu0 0.0
    %256 = vmatprep.subr.mxu0 0.0
    %257 = vmatpush1.xpose.msra.mxu0 0.0
    %258 = vmatprep.subr.mxu0 %v53
    %259 = vmatpush1.xpose.msra.mxu0 %v52
    %260 = vmatprep.subr.mxu0 0.0
    %261 = vmatpush2.xpose.msra.mxu0 0.0
    %262 = vmatprep.subr.mxu0 0.0
    %263 = vmatpush2.xpose.msra.mxu0 0.0
    %264 = vmatprep.subr.mxu0 0.0
    %265 = vmatpush2.xpose.msra.mxu0 0.0
    %266 = vmatprep.subr.mxu0 0.0
    %267 = vmatpush2.xpose.msra.mxu0 0.0
    %268 = vmatprep.subr.mxu0 0.0
    %269 = vmatpush2.xpose.msra.mxu0 0.0
    %270 = vmatprep.subr.mxu0 0.0
    %271 = vmatpush2.xpose.msra.mxu0 0.0
    %272 = vmatprep.subr.mxu0 0.0
    %273 = vmatpush2.xpose.msra.mxu0 0.0
    %274 = vmatprep.subr.mxu0 0.0
    %275 = vmatpush2.xpose.msra.mxu0 0.0
    %276 = vmatprep.subr.mxu0 0.0
    %277 = vmatpush2.xpose.msra.mxu0 0.0
    %278 = vmatprep.subr.mxu0 0.0
    %279 = vmatpush2.xpose.msra.mxu0 0.0
    %280 = vmatprep.subr.mxu0 0.0
    %281 = vmatpush2.xpose.msra.mxu0 0.0
    %282 = vmatprep.subr.mxu0 0.0
    %283 = vmatpush2.xpose.msra.mxu0 0.0
    %284 = vmatprep.subr.mxu0 0.0
    %285 = vmatpush2.xpose.msra.mxu0 0.0
    %286 = vmatprep.subr.mxu0 0.0
    %287 = vmatpush2.xpose.msra.mxu0 0.0
    %288 = vmatprep.subr.mxu0 0.0
    %289 = vmatpush2.xpose.msra.mxu0 0.0
    %290 = vmatprep.subr.mxu0 0.0
    %291 = vmatpush2.xpose.msra.mxu0 0.0
    %292 = vmatprep.mubr.f32.mxu0 %v220
    %293 = vmatmul.mubr.f32.gmra.mxu0 %v219
    %v294 = vpop.f32.mrf.mxu0
    %v295 = vadd.f32 %v226, %v294
    %v296 = vpop.f32.mrf.mxu0
    %297 = vdwg.mxu0
    %298 = vmatprep.subr.mxu0 0.0
    %299 = vmatpush1.xpose.msra.mxu0 0.0
    %300 = vmatprep.subr.mxu0 0.0
    %301 = vmatpush1.xpose.msra.mxu0 0.0
    %302 = vmatprep.subr.mxu0 0.0
    %303 = vmatpush1.xpose.msra.mxu0 0.0
    %304 = vmatprep.subr.mxu0 0.0
    %305 = vmatpush1.xpose.msra.mxu0 0.0
    %306 = vmatprep.subr.mxu0 0.0
    %307 = vmatpush1.xpose.msra.mxu0 0.0
    %308 = vmatprep.subr.mxu0 0.0
    %309 = vmatpush1.xpose.msra.mxu0 0.0
    %310 = vmatprep.subr.mxu0 0.0
    %311 = vmatpush1.xpose.msra.mxu0 0.0
    %312 = vmatprep.subr.mxu0 0.0
    %313 = vmatpush1.xpose.msra.mxu0 0.0
    %314 = vmatprep.subr.mxu0 0.0
    %315 = vmatpush1.xpose.msra.mxu0 0.0
    %316 = vmatprep.subr.mxu0 0.0
    %317 = vmatpush1.xpose.msra.mxu0 0.0
    %318 = vmatprep.subr.mxu0 0.0
    %319 = vmatpush1.xpose.msra.mxu0 0.0
    %320 = vmatprep.subr.mxu0 0.0
    %321 = vmatpush1.xpose.msra.mxu0 0.0
    %322 = vmatprep.subr.mxu0 0.0
    %323 = vmatpush1.xpose.msra.mxu0 0.0
    %324 = vmatprep.subr.mxu0 0.0
    %325 = vmatpush1.xpose.msra.mxu0 0.0
    %326 = vmatprep.subr.mxu0 0.0
    %327 = vmatpush1.xpose.msra.mxu0 0.0
    %328 = vmatprep.subr.mxu0 0.0
    %329 = vmatpush1.xpose.msra.mxu0 %v54
    %330 = vmatprep.subr.mxu0 0.0
    %331 = vmatpush2.xpose.msra.mxu0 0.0
    %332 = vmatprep.subr.mxu0 0.0
    %333 = vmatpush2.xpose.msra.mxu0 0.0
    %334 = vmatprep.subr.mxu0 0.0
    %335 = vmatpush2.xpose.msra.mxu0 0.0
    %336 = vmatprep.subr.mxu0 0.0
    %337 = vmatpush2.xpose.msra.mxu0 0.0
    %338 = vmatprep.subr.mxu0 0.0
    %339 = vmatpush2.xpose.msra.mxu0 0.0
    %340 = vmatprep.subr.mxu0 0.0
    %341 = vmatpush2.xpose.msra.mxu0 0.0
    %342 = vmatprep.subr.mxu0 0.0
    %343 = vmatpush2.xpose.msra.mxu0 0.0
    %344 = vmatprep.subr.mxu0 0.0
    %345 = vmatpush2.xpose.msra.mxu0 0.0
    %346 = vmatprep.subr.mxu0 0.0
    %347 = vmatpush2.xpose.msra.mxu0 0.0
    %348 = vmatprep.subr.mxu0 0.0
    %349 = vmatpush2.xpose.msra.mxu0 0.0
    %350 = vmatprep.subr.mxu0 0.0
    %351 = vmatpush2.xpose.msra.mxu0 0.0
    %352 = vmatprep.subr.mxu0 0.0
    %353 = vmatpush2.xpose.msra.mxu0 0.0
    %354 = vmatprep.subr.mxu0 0.0
    %355 = vmatpush2.xpose.msra.mxu0 0.0
    %356 = vmatprep.subr.mxu0 0.0
    %357 = vmatpush2.xpose.msra.mxu0 0.0
    %358 = vmatprep.subr.mxu0 0.0
    %359 = vmatpush2.xpose.msra.mxu0 0.0
    %360 = vmatprep.subr.mxu0 0.0
    %361 = vmatpush2.xpose.msra.mxu0 0.0
    %362 = vmatprep.mubr.f32.mxu0 0.0
    %363 = vmatmul.mubr.f32.gmra.mxu0 %v221
    %v364 = vpop.f32.mrf.mxu0
    %v365 = vadd.f32 %v295, %v364
    %v366 = vpop.f32.mrf.mxu0
    %367 = vdwg.mxu0
    %vm368 = vcmask 64512
    %369 = vst.msk [vmem:[#allocation7] sm:$0xff] %vm368, %v365
    // Predicated region
    $region18: #{tpu_custom_call.1} parent=1 // pred_check
      _
    $region19: #{tpu_custom_call.1} parent=1 // pred_check_branch
      %371 = sbr.rel (0) target = $region21
    $region20: #{tpu_custom_call.1} parent=1 // pred_region
      %s373 = ssub.s32 128, 128
      %374 = vsyncadd [#allocation4], %s373
      %s376 = sshll.u32 [#allocation7], 4
      %s377 = int_to_ptr.vmem [resolvable:$true] %s376
      %379 = dma.vmem_to_hbm [thread:$0]  %s377, 128, %s2, [#allocation4]
    $region21: #{tpu_custom_call.1} parent=1 // pred_fallthru
      _
    // Predicated region
    $region22: #{tpu_custom_call.1} parent=1 // pred_check
      _
    $region23: #{tpu_custom_call.1} parent=1 // pred_check_branch
      %381 = sbr.rel (0) target = $region25
    $region24: #{tpu_custom_call.1} parent=1 // pred_region
      %382 = dma.done [#allocation4], 128
    $region25: #{tpu_custom_call.1} parent=1 // pred_fallthru
      _
    %383 = vsyncpa [#allocation3], 1
    %384 = vsyncpa [#allocation6], 1
    %385 = vsyncpa [#allocation4], 1

</llo_original>
